<compile_context>
chip_gen: v5e
topology: v5e:2x2
jax: 0.10.0
libtpu: 0.0.40
codegen_flags: <defaults>
</compile_context>

<pallas_src>
import functools

import jax
import jax.numpy as jnp
from jax.experimental import pallas as pl
from jax.experimental.pallas import tpu as pltpu


def attention_kernel(B, S, latent_ref, hidden_ref, wl_ref, wh_ref,
                     bias_ref, wj_ref, out_ref):
    # latent_ref: (B*S, L) bf16       hidden_ref: (B, H) bf16
    # wl_ref:     (L, Ap)  bf16       wh_ref:     (H, Ap) bf16
    # bias_ref:   (1, Ap)  f32  (bl + bh fused)
    # wj_ref:     (1, Ap)  f32  (joint weight row; padding is zero)
    # out_ref:    (B, S)   f32
    la = jnp.dot(latent_ref[...], wl_ref[...],
                 preferred_element_type=jnp.float32)            # (B*S, Ap)
    ha = jnp.dot(hidden_ref[...], wh_ref[...],
                 preferred_element_type=jnp.float32)            # (B, Ap)
    ha = ha + bias_ref[...]                                     # fused bias

    Ap = la.shape[-1]
    z = jnp.maximum(la.reshape(B, S, Ap) + ha[:, None, :], 0.0)  # (B, S, Ap)

    # Joint projection as a VPU weighted-sum (avoids an N=1 MXU matmul).
    # b_joint is omitted: a constant shift cancels under softmax.
    joint = jnp.sum(z * wj_ref[...][None], axis=-1)             # (B, S)

    # Per-batch softmax over the sequence dim.
    # Exact f32 divide for the normalization (the approximate EUP reciprocal
    # leaves ~1e-3 relative error in the row sums, which is why the previous
    # version failed the row-sum check).  The divide is (B,1)-shaped: cheap.
    m = jnp.max(joint, axis=-1, keepdims=True)
    e = jnp.exp(joint - m)
    out_ref[...] = e / jnp.sum(e, axis=-1, keepdims=True)


def attention_forward(latent_repr, h_t, params):
    B, S, L = latent_repr.shape
    if h_t is None:  # original module's `hidden_repr is None` branch
        h_t = jnp.zeros((B, 1, params["wh"].shape[0]), jnp.float32)
    H = h_t.shape[-1]
    A = params["wl"].shape[1]

    # Pad attention dim to a multiple of 128 lanes (zeros -> no numeric change;
    # padded columns contribute nothing because the wj row is zero there).
    Ap = max(128, ((A + 127) // 128) * 128)
    pad = Ap - A

    wl = jnp.pad(params["wl"], ((0, 0), (0, pad))).astype(jnp.bfloat16)   # (L, Ap)
    wh = jnp.pad(params["wh"], ((0, 0), (0, pad))).astype(jnp.bfloat16)   # (H, Ap)
    bias = jnp.pad(params["bl"] + params["bh"], ((0, 0), (0, pad)))       # (1, Ap) f32
    wj = jnp.pad(params["wj"].T, ((0, 0), (0, pad)))                      # (1, Ap) f32

    x = latent_repr.reshape(B * S, L).astype(jnp.bfloat16)                # (B*S, L)
    h = h_t.reshape(B, H).astype(jnp.bfloat16)                            # (B, H)

    kernel = functools.partial(attention_kernel, B, S)

    out = pl.pallas_call(
        kernel,
        out_shape=jax.ShapeDtypeStruct((B, S), jnp.float32),
        grid_spec=pltpu.PrefetchScalarGridSpec(
            num_scalar_prefetch=0,
            grid=(1,),                      # whole problem in one step
            in_specs=[
                pl.BlockSpec((B * S, L), lambda i: (0, 0)),   # latent (flat)
                pl.BlockSpec((B, H),     lambda i: (0, 0)),   # hidden
                pl.BlockSpec((L, Ap),    lambda i: (0, 0)),   # W_latent^T (padded)
                pl.BlockSpec((H, Ap),    lambda i: (0, 0)),   # W_hidden^T (padded)
                pl.BlockSpec((1, Ap),    lambda i: (0, 0)),   # fused bias
                pl.BlockSpec((1, Ap),    lambda i: (0, 0)),   # W_joint row
            ],
            out_specs=pl.BlockSpec((B, S), lambda i: (0, 0)),
        ),
        compiler_params=pltpu.CompilerParams(
            dimension_semantics=("arbitrary",)),
    )(x, h, wl, wh, bias, wj)

    return out   # (B, S)


def init_params(key, latent_dim, hidden_dim, attention_dim):
    """Deterministic PyTorch-Linear-style init (uniform +-1/sqrt(fan_in)).

    Weights stored transposed: (in_features, out_features)."""
    ks = jax.random.split(key, 6)

    def lin(kw, kb, fan_in, fan_out):
        bound = 1.0 / jnp.sqrt(fan_in)
        w = jax.random.uniform(kw, (fan_in, fan_out), jnp.float32, -bound, bound)
        b = jax.random.uniform(kb, (1, fan_out), jnp.float32, -bound, bound)
        return w, b

    wl, bl = lin(ks[0], ks[1], latent_dim, attention_dim)
    wh, bh = lin(ks[2], ks[3], hidden_dim, attention_dim)
    wj, bj = lin(ks[4], ks[5], attention_dim, 1)
    return dict(wl=wl, bl=bl, wh=wh, bh=bh, wj=wj, bj=bj)


def attention_reference(latent_repr, h_t, p):
    la = latent_repr @ p["wl"] + p["bl"]                              # (B, S, A)
    ha = h_t @ p["wh"] + p["bh"]                                      # (B, 1, A)
    joint = (jnp.maximum(la + ha, 0.0) @ p["wj"] + p["bj"])[..., 0]   # (B, S)
    return jax.nn.softmax(joint, axis=-1)


if __name__ == "__main__":
    B, S = 2, 8
    latent_dim, hidden_dim, attention_dim = 32, 32, 16

    key = jax.random.PRNGKey(0)
    k_lat, k_hid, k_par = jax.random.split(key, 3)

    latent_repr = jax.random.normal(k_lat, (B, S, latent_dim), jnp.float32)
    h_t = jax.random.normal(k_hid, (B, 1, hidden_dim), jnp.float32)
    params = init_params(k_par, latent_dim, hidden_dim, attention_dim)

    attn_w = attention_forward(latent_repr, h_t, params)
    attn_w = jax.block_until_ready(attn_w)

    ref = attention_reference(latent_repr, h_t, params)
    assert attn_w.shape == (B, S)
    # bf16 MXU inputs -> slightly looser tolerance vs. the f32 reference.
    assert jnp.allclose(attn_w, ref, atol=2e-2, rtol=2e-2)
    # rows must sum to 1 (exact f32 divide in the kernel).
    assert jnp.allclose(jnp.sum(attn_w, axis=-1), 1.0, atol=1e-3)

    print("KERNEL_OK")
</pallas_src>

<mosaic_0001>
module attributes {stable_mosaic.version = 11 : i64} {
  func.func @attention_kernel(%arg0: i32, %arg1: memref<16x32xbf16, #tpu.memory_space<vmem>>, %arg2: memref<2x32xbf16, #tpu.memory_space<vmem>>, %arg3: memref<32x128xbf16, #tpu.memory_space<vmem>>, %arg4: memref<32x128xbf16, #tpu.memory_space<vmem>>, %arg5: memref<1x128xf32, #tpu.memory_space<vmem>>, %arg6: memref<1x128xf32, #tpu.memory_space<vmem>>, %arg7: memref<2x8xf32, #tpu.memory_space<vmem>>) attributes {dimension_semantics = [#tpu.dimension_semantics<arbitrary>], iteration_bounds = array<i64: 1>, scalar_prefetch = 0 : i64, scratch_operands = 0 : i64, tpu.core_type = #tpu.core_type<tc>, window_params = [{pipeline_mode = #tpu.pipeline_mode<synchronous>, transform_indices = @transform_0, window_bounds = array<i64: 16, 32>}, {pipeline_mode = #tpu.pipeline_mode<synchronous>, transform_indices = @transform_1, window_bounds = array<i64: 2, 32>}, {pipeline_mode = #tpu.pipeline_mode<synchronous>, transform_indices = @transform_2, window_bounds = array<i64: 32, 128>}, {pipeline_mode = #tpu.pipeline_mode<synchronous>, transform_indices = @transform_3, window_bounds = array<i64: 32, 128>}, {pipeline_mode = #tpu.pipeline_mode<synchronous>, transform_indices = @transform_4, window_bounds = array<i64: 1, 128>}, {pipeline_mode = #tpu.pipeline_mode<synchronous>, transform_indices = @transform_5, window_bounds = array<i64: 1, 128>}, {pipeline_mode = #tpu.pipeline_mode<synchronous>, transform_indices = @transform_6, window_bounds = array<i64: 2, 8>}]} {
    %c0 = arith.constant 0 : index
    %c0_0 = arith.constant 0 : index
    %0 = vector.load %arg1[%c0, %c0_0] : memref<16x32xbf16, #tpu.memory_space<vmem>>, vector<16x32xbf16>
    %c0_1 = arith.constant 0 : index
    %c0_2 = arith.constant 0 : index
    %1 = vector.load %arg3[%c0_1, %c0_2] : memref<32x128xbf16, #tpu.memory_space<vmem>>, vector<32x128xbf16>
    %cst = arith.constant dense<0.000000e+00> : vector<16x128xf32>
    %2 = tpu.matmul %0, %1, %cst {dimension_numbers = #tpu.dot_dimension_numbers<[1], [0], [0], [1], [0, 0, 1, 1], [], []>} : vector<16x32xbf16>, vector<32x128xbf16>, vector<16x128xf32> -> vector<16x128xf32>
    %c0_3 = arith.constant 0 : index
    %c0_4 = arith.constant 0 : index
    %3 = vector.load %arg2[%c0_3, %c0_4] : memref<2x32xbf16, #tpu.memory_space<vmem>>, vector<2x32xbf16>
    %c0_5 = arith.constant 0 : index
    %c0_6 = arith.constant 0 : index
    %4 = vector.load %arg4[%c0_5, %c0_6] : memref<32x128xbf16, #tpu.memory_space<vmem>>, vector<32x128xbf16>
    %cst_7 = arith.constant dense<0.000000e+00> : vector<2x128xf32>
    %5 = tpu.matmul %3, %4, %cst_7 {dimension_numbers = #tpu.dot_dimension_numbers<[1], [0], [0], [1], [0, 0, 1, 1], [], []>} : vector<2x32xbf16>, vector<32x128xbf16>, vector<2x128xf32> -> vector<2x128xf32>
    %c0_8 = arith.constant 0 : index
    %c0_9 = arith.constant 0 : index
    %6 = vector.load %arg5[%c0_8, %c0_9] : memref<1x128xf32, #tpu.memory_space<vmem>>, vector<1x128xf32>
    %7 = vector.broadcast %6 : vector<1x128xf32> to vector<2x128xf32>
    %8 = arith.addf %5, %7 : vector<2x128xf32>
    %9 = vector.shape_cast %2 : vector<16x128xf32> to vector<2x8x128xf32>
    %10 = vector.shape_cast %8 : vector<2x128xf32> to vector<2x1x128xf32>
    %11 = vector.broadcast %10 : vector<2x1x128xf32> to vector<2x8x128xf32>
    %12 = arith.addf %9, %11 : vector<2x8x128xf32>
    %cst_10 = arith.constant 0.000000e+00 : f32
    %13 = vector.broadcast %cst_10 : f32 to vector<2x8x128xf32>
    %14 = arith.maximumf %12, %13 : vector<2x8x128xf32>
    %c0_11 = arith.constant 0 : index
    %c0_12 = arith.constant 0 : index
    %15 = vector.load %arg6[%c0_11, %c0_12] : memref<1x128xf32, #tpu.memory_space<vmem>>, vector<1x128xf32>
    %16 = vector.shape_cast %15 : vector<1x128xf32> to vector<1x1x128xf32>
    %17 = vector.broadcast %16 : vector<1x1x128xf32> to vector<2x8x128xf32>
    %18 = arith.mulf %14, %17 : vector<2x8x128xf32>
    %cst_13 = arith.constant dense<0.000000e+00> : vector<2x8xf32>
    %19 = vector.multi_reduction <add>, %18, %cst_13 [2] : vector<2x8x128xf32> to vector<2x8xf32>
    %cst_14 = arith.constant dense<0xFF800000> : vector<2xf32>
    %20 = vector.multi_reduction <maximumf>, %19, %cst_14 [1] : vector<2x8xf32> to vector<2xf32>
    %21 = vector.shape_cast %20 : vector<2xf32> to vector<2x1xf32>
    %22 = vector.broadcast %21 : vector<2x1xf32> to vector<2x8xf32>
    %23 = arith.subf %19, %22 : vector<2x8xf32>
    %24 = math.exp %23 : vector<2x8xf32>
    %cst_15 = arith.constant dense<0.000000e+00> : vector<2xf32>
    %25 = vector.multi_reduction <add>, %24, %cst_15 [1] : vector<2x8xf32> to vector<2xf32>
    %26 = vector.shape_cast %25 : vector<2xf32> to vector<2x1xf32>
    %27 = vector.broadcast %26 : vector<2x1xf32> to vector<2x8xf32>
    %28 = arith.divf %24, %27 : vector<2x8xf32>
    %c0_16 = arith.constant 0 : index
    %c0_17 = arith.constant 0 : index
    %29 = vector.load %arg7[%c0_16, %c0_17] : memref<2x8xf32, #tpu.memory_space<vmem>>, vector<2x8xf32>
    tpu.vector_store %arg7[%c0_16, %c0_17], %28 {strides = array<i32>} : memref<2x8xf32, #tpu.memory_space<vmem>>, vector<2x8xf32>,
    return
  }
  func.func @transform_0(%arg0: i32) -> (i32, i32) {
    %c0_i32 = arith.constant 0 : i32
    %c0_i32_0 = arith.constant 0 : i32
    %c0_i32_1 = arith.constant 0 : i32
    return %c0_i32, %c0_i32_0 : i32, i32
  }
  func.func @transform_1(%arg0: i32) -> (i32, i32) {
    %c0_i32 = arith.constant 0 : i32
    %c0_i32_0 = arith.constant 0 : i32
    %c0_i32_1 = arith.constant 0 : i32
    return %c0_i32, %c0_i32_0 : i32, i32
  }
  func.func @transform_2(%arg0: i32) -> (i32, i32) {
    %c0_i32 = arith.constant 0 : i32
    %c0_i32_0 = arith.constant 0 : i32
    %c0_i32_1 = arith.constant 0 : i32
    return %c0_i32, %c0_i32_0 : i32, i32
  }
  func.func @transform_3(%arg0: i32) -> (i32, i32) {
    %c0_i32 = arith.constant 0 : i32
    %c0_i32_0 = arith.constant 0 : i32
    %c0_i32_1 = arith.constant 0 : i32
    return %c0_i32, %c0_i32_0 : i32, i32
  }
  func.func @transform_4(%arg0: i32) -> (i32, i32) {
    %c0_i32 = arith.constant 0 : i32
    %c0_i32_0 = arith.constant 0 : i32
    %c0_i32_1 = arith.constant 0 : i32
    return %c0_i32, %c0_i32_0 : i32, i32
  }
  func.func @transform_5(%arg0: i32) -> (i32, i32) {
    %c0_i32 = arith.constant 0 : i32
    %c0_i32_0 = arith.constant 0 : i32
    %c0_i32_1 = arith.constant 0 : i32
    return %c0_i32, %c0_i32_0 : i32, i32
  }
  func.func @transform_6(%arg0: i32) -> (i32, i32) {
    %c0_i32 = arith.constant 0 : i32
    %c0_i32_0 = arith.constant 0 : i32
    %c0_i32_1 = arith.constant 0 : i32
    return %c0_i32, %c0_i32_0 : i32, i32
  }
}

</mosaic_0001>

<llo_original>
// kernel: tpu_custom_call.1
$region0: #{tpu_custom_call.1}
  #allocation0 [shape = 'u32[]', space=smem, size = 0x4, offset = 0x4, fixed_abs, tag = 'smem constant byte address 0x4 - core index']
  #allocation1 [shape = 'u32[72,128]{1,0:T(1,128)}', space=vmem, size = 0x9000, scoped, tag = 'internal scratch']
  %s0 = inlined_call_operand.hbm [shape: bf16[16,32], index: 0, kind: input, shape index: {}]
  %s1 = inlined_call_operand.hbm [shape: bf16[2,32], index: 1, kind: input, shape index: {}]
  %s2 = inlined_call_operand.hbm [shape: bf16[32,128], index: 2, kind: input, shape index: {}]
  %s3 = inlined_call_operand.hbm [shape: bf16[32,128], index: 3, kind: input, shape index: {}]
  %s4 = inlined_call_operand.vmem [shape: f32[1,128], index: 4, kind: input, shape index: {}]
  %s5 = inlined_call_operand.vmem [shape: f32[1,128], index: 5, kind: input, shape index: {}]
  %s6 = inlined_call_operand.hbm [shape: f32[2,8], index: 6, kind: output, shape index: {}]
  %s7 = sld [smem:[#allocation0]]
  $region50: #{tpu_custom_call.1} parent=0
    _
  %s9 = ssub.s32 1, %s7
  %s10 = scalar_select 0, %s9, %s7
  $region1: #{tpu_custom_call.1} parent=0
    #allocation2 [shape = 'u8[4096]{0}', space=vmem, size = 0x1000, scoped, tag = 'input window, operand 0, single buffered']
    #allocation3 [shape = 's32[1]{0}', space=sflag, size = 0x4, scoped, tag = 'scoped memory for tpu_custom_call.1']
    #allocation4 [shape = 's32[1]{0}', space=sflag, size = 0x4, scoped, tag = 'scoped memory for tpu_custom_call.1']
    #allocation5 [shape = 'u8[512]{0}', space=vmem, size = 0x400, scoped, tag = 'input window, operand 1, single buffered']
    #allocation6 [shape = 's32[1]{0}', space=sflag, size = 0x4, scoped, tag = 'scoped memory for tpu_custom_call.1']
    #allocation7 [shape = 'u8[8192]{0}', space=vmem, size = 0x2000, scoped, tag = 'input window, operand 2, single buffered']
    #allocation8 [shape = 'u8[8192]{0}', space=vmem, size = 0x2000, scoped, tag = 'input window, operand 3, single buffered']
    #allocation9 [shape = 's32[1]{0}', space=sflag, size = 0x4, scoped, tag = 'scoped memory for tpu_custom_call.1']
    #allocation10 [shape = 'u8[1024]{0}', space=vmem, size = 0x400, scoped, tag = 'output window, operand 0, single buffered']
    %11 = vsyncpa [#allocation3], 0
    %12 = vsyncpa [#allocation6], 0
    %13 = vsyncpa [#allocation9], 0
    %14 = vsyncpa [#allocation4], 0
    // Predicated region
    $region2: #{tpu_custom_call.1} parent=1 // pred_check
      _
    $region3: #{tpu_custom_call.1} parent=1 // pred_check_branch
      %16 = sbr.rel (0) target = $region5
    $region4: #{tpu_custom_call.1} parent=1 // pred_region
      %18 = vsyncadd [#allocation3], 0
      %s19 = sshll.u32 %s0, 4
      %s20 = int_to_ptr.hbm [resolvable:$true] %s19
      %s21 = sshll.u32 [#allocation2], 4
      %s22 = int_to_ptr.vmem [resolvable:$true] %s21
      %27 = dma.hbm_to_vmem [thread:$0]  %s20, 128, %s22, [#allocation3], 64, 64, 4
    $region5: #{tpu_custom_call.1} parent=1 // pred_fallthru
      _
    // Predicated region
    $region6: #{tpu_custom_call.1} parent=1 // pred_check
      _
    $region7: #{tpu_custom_call.1} parent=1 // pred_check_branch
      %29 = sbr.rel (0) target = $region9
    $region8: #{tpu_custom_call.1} parent=1 // pred_region
      %31 = vsyncadd [#allocation6], 0
      %s33 = sshll.u32 %s1, 4
      %s34 = int_to_ptr.hbm [resolvable:$true] %s33
      %s35 = sshll.u32 [#allocation5], 4
      %s36 = int_to_ptr.vmem [resolvable:$true] %s35
      %38 = dma.hbm_to_vmem [thread:$0]  %s34, 16, %s36, [#allocation6]
    $region9: #{tpu_custom_call.1} parent=1 // pred_fallthru
      _
    // Predicated region
    $region10: #{tpu_custom_call.1} parent=1 // pred_check
      _
    $region11: #{tpu_custom_call.1} parent=1 // pred_check_branch
      %40 = sbr.rel (0) target = $region13
    $region12: #{tpu_custom_call.1} parent=1 // pred_region
      %42 = vsyncadd [#allocation6], 0
      %s43 = sshll.u32 %s2, 4
      %s44 = int_to_ptr.hbm [resolvable:$true] %s43
      %s45 = sshll.u32 [#allocation7], 4
      %s46 = int_to_ptr.vmem [resolvable:$true] %s45
      %51 = dma.hbm_to_vmem [thread:$0]  %s44, 256, %s46, [#allocation6], 64, 64, 4
    $region13: #{tpu_custom_call.1} parent=1 // pred_fallthru
      _
    // Predicated region
    $region14: #{tpu_custom_call.1} parent=1 // pred_check
      _
    $region15: #{tpu_custom_call.1} parent=1 // pred_check_branch
      %53 = sbr.rel (0) target = $region17
    $region16: #{tpu_custom_call.1} parent=1 // pred_region
      %55 = vsyncadd [#allocation9], 0
      %s56 = sshll.u32 %s3, 4
      %s57 = int_to_ptr.hbm [resolvable:$true] %s56
      %s58 = sshll.u32 [#allocation8], 4
      %s59 = int_to_ptr.vmem [resolvable:$true] %s58
      %64 = dma.hbm_to_vmem [thread:$0]  %s57, 256, %s59, [#allocation9], 64, 64, 4
    $region17: #{tpu_custom_call.1} parent=1 // pred_fallthru
      _
    // Predicated region
    $region18: #{tpu_custom_call.1} parent=1 // pred_check
      _
    $region19: #{tpu_custom_call.1} parent=1 // pred_check_branch
      %66 = sbr.rel (0) target = $region21
    $region20: #{tpu_custom_call.1} parent=1 // pred_region
      _
    $region21: #{tpu_custom_call.1} parent=1 // pred_fallthru
      _
    // Predicated region
    $region22: #{tpu_custom_call.1} parent=1 // pred_check
      _
    $region23: #{tpu_custom_call.1} parent=1 // pred_check_branch
      %68 = sbr.rel (0) target = $region25
    $region24: #{tpu_custom_call.1} parent=1 // pred_region
      _
    $region25: #{tpu_custom_call.1} parent=1 // pred_fallthru
      _
    // Predicated region
    $region26: #{tpu_custom_call.1} parent=1 // pred_check
      _
    $region27: #{tpu_custom_call.1} parent=1 // pred_check_branch
      %70 = sbr.rel (0) target = $region29
    $region28: #{tpu_custom_call.1} parent=1 // pred_region
      %72 = dma.done [#allocation3], 128
    $region29: #{tpu_custom_call.1} parent=1 // pred_fallthru
      _
    // Predicated region
    $region30: #{tpu_custom_call.1} parent=1 // pred_check
      _
    $region31: #{tpu_custom_call.1} parent=1 // pred_check_branch
      %74 = sbr.rel (0) target = $region33
    $region32: #{tpu_custom_call.1} parent=1 // pred_region
      %76 = dma.done [#allocation6], 16
    $region33: #{tpu_custom_call.1} parent=1 // pred_fallthru
      _
    // Predicated region
    $region34: #{tpu_custom_call.1} parent=1 // pred_check
      _
    $region35: #{tpu_custom_call.1} parent=1 // pred_check_branch
      %78 = sbr.rel (0) target = $region37
    $region36: #{tpu_custom_call.1} parent=1 // pred_region
      %80 = dma.done [#allocation6], 256
    $region37: #{tpu_custom_call.1} parent=1 // pred_fallthru
      _
    // Predicated region
    $region38: #{tpu_custom_call.1} parent=1 // pred_check
      _
    $region39: #{tpu_custom_call.1} parent=1 // pred_check_branch
      %82 = sbr.rel (0) target = $region41
    $region40: #{tpu_custom_call.1} parent=1 // pred_region
      %84 = dma.done [#allocation9], 256
    $region41: #{tpu_custom_call.1} parent=1 // pred_fallthru
      _
    %v86 = vld [vmem:[#allocation2] sm:$0xf]
    %v87 = vld [vmem:[#allocation2 + $0x4] sm:$0xf]
    %v88 = vld [vmem:[#allocation7] sm:$0xf]
    %v89 = vld [vmem:[#allocation7 + $0x4] sm:$0xf]
    %v90 = vld [vmem:[#allocation7 + $0x8] sm:$0xf]
    %v91 = vld [vmem:[#allocation7 + $0xc] sm:$0xf]
    %v94 = vunpack.c.l.b16 %v86
    %v95 = vunpack.c.l.b16 %v87
    %v96 = vpack.c.b16 %v95, %v94
    %v101 = vunpack.c.l.b16 %v88
    %v102 = vunpack.c.l.b16 %v89
    %v103 = vunpack.c.l.b16 %v90
    %v104 = vunpack.c.l.b16 %v91
    %v105 = vpack.c.b16 %v102, %v101
    %v106 = vpack.c.b16 %v104, %v103
    %vm109 = vcmask 261120
    %v111 = vsel %vm109, %v96, 0
    %113 = vmatpush.bf16.msra.mxu0 0
    %114 = vmatpush.bf16.msra.mxu0 0
    %115 = vmatpush.bf16.msra.mxu0 0
    %116 = vmatpush.bf16.msra.mxu0 0
    %117 = vmatpush.bf16.msra.mxu0 0
    %118 = vmatpush.bf16.msra.mxu0 0
    %119 = vmatpush.bf16.msra.mxu0 %v106
    %120 = vmatpush.bf16.msra.mxu0 %v105
    %121 = vmatmul.bf16.gmra.mxu0 %v111
    %v122 = vpop.f32.mrf.mxu0
    %v123 = vadd.f32 0.0, %v122
    %v124 = vpop.f32.mrf.mxu0
    %v125 = vadd.f32 0.0, %v124
    %126 = vdwg.mxu0
    %v127 = vld [vmem:[#allocation5] sm:$0x1]
    %v128 = vld [vmem:[#allocation8] sm:$0xf]
    %v129 = vld [vmem:[#allocation8 + $0x4] sm:$0xf]
    %v130 = vld [vmem:[#allocation8 + $0x8] sm:$0xf]
    %v131 = vld [vmem:[#allocation8 + $0xc] sm:$0xf]
    %v132 = vld [vmem:[%s4] sm:$0x1]
    %v134 = vperm.slane %v132, 0
    %v140 = vunpack.c.l.b16 %v128
    %v141 = vunpack.c.l.b16 %v129
    %v142 = vunpack.c.l.b16 %v130
    %v143 = vunpack.c.l.b16 %v131
    %v144 = vpack.c.b16 %v141, %v140
    %v145 = vpack.c.b16 %v143, %v142
    %v149 = vsel %vm109, %v127, 0
    %151 = vmatpush.bf16.msra.mxu0 0
    %152 = vmatpush.bf16.msra.mxu0 0
    %153 = vmatpush.bf16.msra.mxu0 0
    %154 = vmatpush.bf16.msra.mxu0 0
    %155 = vmatpush.bf16.msra.mxu0 0
    %156 = vmatpush.bf16.msra.mxu0 0
    %157 = vmatpush.bf16.msra.mxu0 %v145
    %158 = vmatpush.bf16.msra.mxu0 %v144
    %159 = vmatmul.bf16.gmra.mxu0 %v149
    %v160 = vpop.f32.mrf.mxu0
    %v161 = vadd.f32 %v134, %v160
    %v162 = vpop.f32.mrf.mxu0
    %163 = vdwg.mxu0
    %v165 = vrot.slane %v161, 1
    %v166 = vperm.slane %v161, 0
    %v167 = vperm.slane %v165, 0
    %v170 = vadd.f32 %v123, %v166
    %v171 = vadd.f32 %v125, %v167
    %v172 = vmax.f32 %v170, 0.0
    %v173 = vmax.f32 %v171, 0.0
    %v174 = vld [vmem:[%s5] sm:$0x1]
    %v176 = vperm.slane %v174, 0
    %v178 = vmul.f32 %v172, %v176
    %v179 = vmul.f32 %v173, %v176
    %180 = vadd.xlane.f32.xlu0 %v178
    %v181 = vpop.xlane.xlu0 %180
    %182 = vadd.xlane.f32.xlu0 %v179
    %v183 = vpop.xlane.xlu0 %182
    %v186 = vlaneseq
    %v187 = vand.u32 %v186, 127
    %v188 = vperm.slane %v181, %v187
    %v189 = vperm.slane %v183, %v187
    %vm190 = vcmask 1041409
    %v191 = vsel %vm190, %v189, %v188
    %vm193 = vcmask 58368
    %v194 = vsel %vm193, %v191, -inf
    %195 = vmax.xlane.f32.xlu0 %v194
    %v196 = vpop.xlane.xlu0 %195
    %v198 = vperm.slane %v196, 0
    %v199 = vperm.slane %v196, 1
    %v202 = vsub.f32 %v181, %v198
    %v203 = vsub.f32 %v183, %v199
    %v204 = vmul.f32 %v202, 1.442695
    %v205 = vpow.pop %v204
    %v206 = vmul.f32 %v203, 1.442695
    %v207 = vpow.pop %v206
    %210 = vset.pattern.permute.xlu0 0
    %211 = vperm.xlu0 %210, %v205
    %v212 = vpop.permute.xlu0 %211
    %213 = vset.pattern.permute.xlu0 0
    %214 = vperm.xlu0 %213, %v207
    %v215 = vpop.permute.xlu0 %214
    %v216 = vperm.slane %v212, %v187
    %v217 = vperm.slane %v215, %v187
    %v218 = vsel %vm190, %v217, %v216
    %v220 = vsel %vm193, %v218, 0.0
    %221 = vadd.xlane.f32.xlu0 %v220
    %v222 = vpop.xlane.xlu0 %221
    %v224 = vperm.slane %v222, 0
    %v225 = vperm.slane %v222, 1
    %v228 = vrcp.pop %v224
    %v229 = vmul.f32 %v224, %v228
    %v230 = vsub.f32 1.0, %v229
    %v231 = vmul.f32 %v228, %v230
    %v232 = vadd.f32 %v228, %v231
    %vm233 = vweird.f32 %v224
    %vm234 = vweird.f32 %v228
    %vm235 = vmor %vm233, %vm234
    %v236 = vsel %vm235, %v228, %v232
    %v237 = vand.u32 2147483647, %v224
    %vm238 = vcmp.eq.f32.partialorder %v237, 8.507059e+37
    %v239 = vand.u32 %v224, 2147483648
    %v240 = vor.u32 1.1754944e-38, %v239
    %v241 = vsel %vm238, %v240, %v236
    %v242 = vmul.f32 %v205, %v241
    %v243 = vrcp.pop %v225
    %v244 = vmul.f32 %v225, %v243
    %v245 = vsub.f32 1.0, %v244
    %v246 = vmul.f32 %v243, %v245
    %v247 = vadd.f32 %v243, %v246
    %vm248 = vweird.f32 %v225
    %vm249 = vweird.f32 %v243
    %vm250 = vmor %vm248, %vm249
    %v251 = vsel %vm250, %v243, %v247
    %v252 = vand.u32 2147483647, %v225
    %vm253 = vcmp.eq.f32.partialorder %v252, 8.507059e+37
    %v254 = vand.u32 %v225, 2147483648
    %v255 = vor.u32 1.1754944e-38, %v254
    %v256 = vsel %vm253, %v255, %v251
    %v257 = vmul.f32 %v207, %v256
    %260 = vset.pattern.permute.xlu0 0
    %261 = vperm.xlu0 %260, %v242
    %v262 = vpop.permute.xlu0 %261
    %263 = vset.pattern.permute.xlu0 0
    %264 = vperm.xlu0 %263, %v257
    %v265 = vpop.permute.xlu0 %264
    %v266 = vperm.slane %v262, %v187
    %v267 = vperm.slane %v265, %v187
    %v268 = vsel %vm190, %v267, %v266
    %270 = vst.msk [vmem:[#allocation10] sm:$0x3] %vm193, %v268
    // Predicated region
    $region42: #{tpu_custom_call.1} parent=1 // pred_check
      _
    $region43: #{tpu_custom_call.1} parent=1 // pred_check_branch
      %272 = sbr.rel (0) target = $region45
    $region44: #{tpu_custom_call.1} parent=1 // pred_region
      %274 = vsyncadd [#allocation4], 0
      %s276 = sshll.u32 [#allocation10], 4
      %s277 = int_to_ptr.vmem [resolvable:$true] %s276
      %s278 = sshll.u32 %s6, 4
      %s279 = int_to_ptr.hbm [resolvable:$true] %s278
      %281 = dma.vmem_to_hbm [thread:$0]  %s277, 32, %s279, [#allocation4]
    $region45: #{tpu_custom_call.1} parent=1 // pred_fallthru
      _
    // Predicated region
    $region46: #{tpu_custom_call.1} parent=1 // pred_check
      _
    $region47: #{tpu_custom_call.1} parent=1 // pred_check_branch
      %283 = sbr.rel (0) target = $region49
    $region48: #{tpu_custom_call.1} parent=1 // pred_region
      %285 = dma.done [#allocation4], 32
    $region49: #{tpu_custom_call.1} parent=1 // pred_fallthru
      _
    %286 = vsyncpa [#allocation3], 1
    %287 = vsyncpa [#allocation6], 1
    %288 = vsyncpa [#allocation9], 1
    %289 = vsyncpa [#allocation4], 1

</llo_original>
